<compile_context>
chip_gen: v7x
topology: tpu7x:2x2x1
jax: 0.10.0
libtpu: 0.0.40
codegen_flags: <defaults>
</compile_context>

<pallas_src>
import jax
import jax.numpy as jnp
from jax import lax
from jax.experimental import pallas as pl
from jax.experimental.pallas import tpu as pltpu


def _round_up(x, m):
    return ((x + m - 1) // m) * m


def _make_seq_kernel(TB, BPAD, HPAD, NPAD):
    def kernel(h0_ref, xproj_ref, wh_ref, out_ref, h_scr):
        # One-time init: seed the recurrent hidden state.
        @pl.when(pl.program_id(0) == 0)
        def _():
            h_scr[...] = h0_ref[...]

        wh = wh_ref[...]          # (HPAD, NPAD)  resident across all T steps
        h = h_scr[...]            # (BPAD, HPAD)  recurrent carry (VMEM)

        # Statically unrolled TB-step inner loop (tiny tiles -> no vreg
        # pressure; gives the LLO scheduler the whole chain at once).
        for s in range(TB):
            # xproj already contains x_t @ W_x + b (with -1e30 baked into the
            # padded logit columns), so one matmul + one add per step.
            fused = (jnp.dot(h, wh, preferred_element_type=jnp.float32)
                     + xproj_ref[s])

            h = fused[:, :HPAD]                     # 128-lane aligned slice
            logits = fused[:, HPAD:]                # (BPAD, OPAD)

            # Numerically stable log-softmax; padded lanes are ~-1e30 so they
            # neither win the max nor contribute to the sum-exp.
            m = jnp.max(logits, axis=1, keepdims=True)
            shifted = logits - m
            lse = jnp.log(jnp.sum(jnp.exp(shifted), axis=1, keepdims=True))

            # Lane-dense 128-aligned stores into the combined output slab.
            out_ref[s, :, :HPAD] = h
            out_ref[s, :, HPAD:] = shifted - lse

        h_scr[...] = h                              # carry to next grid step

    return kernel


def _pack_params(w0, b0, w1, b1, I, H, O, HPAD, OPAD):
    """Fuse + pad the two Linear layers into W_x (I,N), W_h (HPAD,N), b (1,N).

    Column layout of N = HPAD + OPAD:
      [0:H]          -> Hidden_0 columns   (pad columns zero -> carry stays 0)
      [HPAD:HPAD+O]  -> logit columns
      [HPAD+O:]      -> padded logit columns; bias = -1e30 so the hoisted
                        projection delivers already-masked lanes for free.
    """
    NPAD = HPAD + OPAD
    wx = jnp.zeros((I, NPAD), jnp.float32)
    wx = wx.at[:, :H].set(w0[:I])
    wx = wx.at[:, HPAD:HPAD + O].set(w1[:I])

    wh = jnp.zeros((HPAD, NPAD), jnp.float32)
    wh = wh.at[:H, :H].set(w0[I:])
    wh = wh.at[:H, HPAD:HPAD + O].set(w1[I:])

    b = jnp.zeros((1, NPAD), jnp.float32)
    b = b.at[:, :H].set(b0)
    b = b.at[:, HPAD:HPAD + O].set(b1)
    b = b.at[:, HPAD + O:].set(jnp.float32(-1e30))   # bake the softmax mask
    return wx, wh, b


def rnn_sequence(x_seq, h0, w0, b0, w1, b1, tb=8):
    """Run the RNN_ cell over a whole sequence.

    x_seq : (T, B, input_size)  f32
    h0    : (B, hidden_size)    f32
    w0    : (input_size+hidden_size, hidden_size)   (PyTorch weight, transposed)
    b0    : (1, hidden_size)
    w1    : (input_size+hidden_size, output_size)
    b1    : (1, output_size)
    returns (log_softmax_outputs (T, B, output_size),
             hidden_states       (T, B, hidden_size))   # h_{t+1} for each t
    """
    T, B, I = x_seq.shape
    H = w0.shape[1]
    O = w1.shape[1]

    HPAD = _round_up(H, 128)
    OPAD = _round_up(O, 128)
    NPAD = HPAD + OPAD
    BPAD = _round_up(max(B, 8), 8)
    TB = max(1, tb)                       # timesteps per grid step
    TPAD = _round_up(T, TB)

    wx, wh, b = _pack_params(w0, b0, w1, b1, I, H, O, HPAD, OPAD)

    x_pad = jnp.zeros((TPAD, BPAD, I), jnp.float32).at[:T, :B, :].set(x_seq)
    h0_pad = jnp.zeros((BPAD, HPAD), jnp.float32).at[:B, :H].set(h0)

    # Hoisted, non-recurrent projection: one MXU-friendly (T*B, I)x(I, N) GEMM
    # (plain XLA) off the serial critical path.  Bias (incl. the -1e30 logit
    # pad fill) is folded in here.
    xproj = (x_pad.reshape(TPAD * BPAD, I) @ wx + b).reshape(TPAD, BPAD, NPAD)

    kernel = _make_seq_kernel(TB, BPAD, HPAD, NPAD)

    grid_spec = pltpu.PrefetchScalarGridSpec(
        num_scalar_prefetch=0,
        grid=(TPAD // TB,),
        in_specs=[
            pl.BlockSpec((BPAD, HPAD), lambda t: (0, 0)),        # h0 (read @ t=0)
            pl.BlockSpec((TB, BPAD, NPAD), lambda t: (t, 0, 0)),  # xproj block
            pl.BlockSpec((HPAD, NPAD), lambda t: (0, 0)),        # W_h (resident)
        ],
        out_specs=pl.BlockSpec((TB, BPAD, NPAD), lambda t: (t, 0, 0)),
        scratch_shapes=[
            pltpu.VMEM((BPAD, HPAD), jnp.float32),   # recurrent hidden state
        ],
    )

    # Explicit VMEM budget: resident Wh + carry + double-buffered in/out blocks
    # (the default scoped limit is only 16 MiB on v5e).
    vmem_bytes = 4 * (HPAD * NPAD
                      + 2 * BPAD * HPAD
                      + 4 * TB * BPAD * NPAD)
    vmem_limit = min(max(vmem_bytes + (4 << 20), 16 << 20), 64 << 20)

    out_slab = pl.pallas_call(
        kernel,
        out_shape=jax.ShapeDtypeStruct((TPAD, BPAD, NPAD), jnp.float32),
        grid_spec=grid_spec,
        compiler_params=pltpu.CompilerParams(
            dimension_semantics=("arbitrary",),      # time recurrence is serial
            vmem_limit_bytes=vmem_limit),
    )(h0_pad, xproj, wh)

    logp_seq = out_slab[:T, :B, HPAD:HPAD + O]
    hid_seq = out_slab[:T, :B, :H]
    return logp_seq, hid_seq


def rnn_cell(input_tensor, hidden_state, w0, b0, w1, b1):
    """Single-step API matching RNN_.forward: returns (log_softmax_out, new_hidden)."""
    logp, hid = rnn_sequence(input_tensor[None], hidden_state, w0, b0, w1, b1, tb=1)
    return logp[0], hid[0]


def _init_linear(key, in_features, out_features):
    """Deterministic init mimicking nn.Linear default (uniform +/- 1/sqrt(in))."""
    kw, kb = jax.random.split(key)
    bound = 1.0 / jnp.sqrt(jnp.float32(in_features))
    w = jax.random.uniform(kw, (in_features, out_features), jnp.float32,
                           minval=-bound, maxval=bound)   # stored transposed
    b = jax.random.uniform(kb, (1, out_features), jnp.float32,
                           minval=-bound, maxval=bound)
    return w, b


def _rnn_sequence_ref(x_seq, h0, w0, b0, w1, b1):
    def step(h, x):
        comb = jnp.concatenate([x, h], axis=1)
        h_new = comb @ w0 + b0
        logp = jax.nn.log_softmax(comb @ w1 + b1, axis=1)
        return h_new, (logp, h_new)
    _, (outs, hids) = lax.scan(step, h0, x_seq)
    return outs, hids


if __name__ == "__main__":
    input_size = 32
    hidden_size = 32
    output_size = 16
    batch = 2
    seq_len = 6        # e.g. len('Albert')

    key = jax.random.PRNGKey(0)
    k_x, k_w0, k_w1 = jax.random.split(key, 3)

    x_seq = jax.random.normal(k_x, (seq_len, batch, input_size), jnp.float32)
    h0 = jnp.zeros((batch, hidden_size), jnp.float32)       # init_hidden()

    w0, b0 = _init_linear(k_w0, input_size + hidden_size, hidden_size)
    w1, b1 = _init_linear(k_w1, input_size + hidden_size, output_size)

    # Fused sequence kernel (one pallas_call for all T steps).
    seq_fn = jax.jit(rnn_sequence)
    logp_seq, hid_seq = seq_fn(x_seq, h0, w0, b0, w1, b1)
    jax.block_until_ready((logp_seq, hid_seq))

    assert logp_seq.shape == (seq_len, batch, output_size)
    assert hid_seq.shape == (seq_len, batch, hidden_size)

    ref_logp, ref_hid = _rnn_sequence_ref(x_seq, h0, w0, b0, w1, b1)
    assert jnp.allclose(logp_seq, ref_logp, atol=1e-4), "sequence output mismatch"
    assert jnp.allclose(hid_seq, ref_hid, atol=1e-4), "sequence hidden mismatch"

    # Single-step call matches the original RNN_.forward semantics.
    out1, h1 = rnn_cell(x_seq[0], h0, w0, b0, w1, b1)
    jax.block_until_ready((out1, h1))
    comb = jnp.concatenate([x_seq[0], h0], axis=1)
    assert jnp.allclose(out1, jax.nn.log_softmax(comb @ w1 + b1, axis=1),
                        atol=1e-4), "step output mismatch"
    assert jnp.allclose(h1, comb @ w0 + b0, atol=1e-4), "step hidden mismatch"

    print("KERNEL_OK")
</pallas_src>

<mosaic_0001>
module attributes {stable_mosaic.version = 11 : i64} {
  func.func @kernel(%arg0: i32, %arg1: memref<8x128xf32, #tpu.memory_space<vmem>>, %arg2: memref<8x8x256xf32, #tpu.memory_space<vmem>>, %arg3: memref<128x256xf32, #tpu.memory_space<vmem>>, %arg4: memref<8x8x256xf32, #tpu.memory_space<vmem>>, %arg5: memref<8x128xf32, #tpu.memory_space<vmem>>) attributes {dimension_semantics = [#tpu.dimension_semantics<arbitrary>], iteration_bounds = array<i64: 1>, scalar_prefetch = 0 : i64, scratch_operands = 1 : i64, tpu.core_type = #tpu.core_type<tc>, window_params = [{pipeline_mode = #tpu.pipeline_mode<synchronous>, transform_indices = @transform_0, window_bounds = array<i64: 8, 128>}, {transform_indices = @transform_1, window_bounds = array<i64: 8, 8, 256>}, {pipeline_mode = #tpu.pipeline_mode<synchronous>, transform_indices = @transform_2, window_bounds = array<i64: 128, 256>}, {transform_indices = @transform_3, window_bounds = array<i64: 8, 8, 256>}]} {
    %c0_i32 = arith.constant 0 : i32
    %0 = arith.cmpi eq, %arg0, %c0_i32 : i32
    %1 = arith.extui %0 : i1 to i32
    %c0_i32_0 = arith.constant 0 : i32
    %2 = arith.cmpi ne, %1, %c0_i32_0 : i32
    scf.if %2 {
      %c0_93 = arith.constant 0 : index
      %c0_94 = arith.constant 0 : index
      %182 = vector.load %arg1[%c0_93, %c0_94] : memref<8x128xf32, #tpu.memory_space<vmem>>, vector<8x128xf32>
      %c0_95 = arith.constant 0 : index
      %c0_96 = arith.constant 0 : index
      %183 = vector.load %arg5[%c0_95, %c0_96] : memref<8x128xf32, #tpu.memory_space<vmem>>, vector<8x128xf32>
      tpu.vector_store %arg5[%c0_95, %c0_96], %182 {strides = array<i32>} : memref<8x128xf32, #tpu.memory_space<vmem>>, vector<8x128xf32>,
    } else {
    }
    %c0 = arith.constant 0 : index
    %c0_1 = arith.constant 0 : index
    %3 = vector.load %arg3[%c0, %c0_1] : memref<128x256xf32, #tpu.memory_space<vmem>>, vector<128x256xf32>
    %c0_2 = arith.constant 0 : index
    %c0_3 = arith.constant 0 : index
    %4 = vector.load %arg5[%c0_2, %c0_3] : memref<8x128xf32, #tpu.memory_space<vmem>>, vector<8x128xf32>
    %cst = arith.constant dense<0.000000e+00> : vector<8x256xf32>
    %5 = tpu.matmul %4, %3, %cst {dimension_numbers = #tpu.dot_dimension_numbers<[1], [0], [0], [1], [0, 0, 1, 1], [], []>} : vector<8x128xf32>, vector<128x256xf32>, vector<8x256xf32> -> vector<8x256xf32>
    %c0_4 = arith.constant 0 : index
    %c0_5 = arith.constant 0 : index
    %c0_6 = arith.constant 0 : index
    %6 = vector.load %arg2[%c0_4, %c0_5, %c0_6] : memref<8x8x256xf32, #tpu.memory_space<vmem>>, vector<1x8x256xf32>
    %7 = vector.shape_cast %6 : vector<1x8x256xf32> to vector<8x256xf32>
    %8 = arith.addf %5, %7 : vector<8x256xf32>
    %9 = vector.extract_strided_slice %8 {offsets = [0, 0], sizes = [8, 128], strides = [1, 1]} : vector<8x256xf32> to vector<8x128xf32>
    %10 = vector.extract_strided_slice %8 {offsets = [0, 128], sizes = [8, 128], strides = [1, 1]} : vector<8x256xf32> to vector<8x128xf32>
    %cst_7 = arith.constant dense<0xFF800000> : vector<8xf32>
    %11 = vector.multi_reduction <maximumf>, %10, %cst_7 [1] : vector<8x128xf32> to vector<8xf32>
    %12 = vector.shape_cast %11 : vector<8xf32> to vector<8x1xf32>
    %13 = vector.broadcast %12 : vector<8x1xf32> to vector<8x128xf32>
    %14 = arith.subf %10, %13 : vector<8x128xf32>
    %15 = math.exp %14 : vector<8x128xf32>
    %cst_8 = arith.constant dense<0.000000e+00> : vector<8xf32>
    %16 = vector.multi_reduction <add>, %15, %cst_8 [1] : vector<8x128xf32> to vector<8xf32>
    %17 = vector.shape_cast %16 : vector<8xf32> to vector<8x1xf32>
    %18 = math.log %17 : vector<8x1xf32>
    %c0_9 = arith.constant 0 : index
    %c0_10 = arith.constant 0 : index
    %c0_11 = arith.constant 0 : index
    %19 = vector.load %arg4[%c0_9, %c0_10, %c0_11] : memref<8x8x256xf32, #tpu.memory_space<vmem>>, vector<1x8x128xf32>
    %20 = vector.shape_cast %19 : vector<1x8x128xf32> to vector<8x128xf32>
    %21 = vector.shape_cast %9 : vector<8x128xf32> to vector<1x8x128xf32>
    tpu.vector_store %arg4[%c0_9, %c0_10, %c0_11], %21 {strides = array<i32>} : memref<8x8x256xf32, #tpu.memory_space<vmem>>, vector<1x8x128xf32>,
    %22 = vector.broadcast %18 : vector<8x1xf32> to vector<8x128xf32>
    %23 = arith.subf %14, %22 : vector<8x128xf32>
    %c0_12 = arith.constant 0 : index
    %c0_13 = arith.constant 0 : index
    %c128 = arith.constant 128 : index
    %24 = vector.load %arg4[%c0_12, %c0_13, %c128] : memref<8x8x256xf32, #tpu.memory_space<vmem>>, vector<1x8x128xf32>
    %25 = vector.shape_cast %24 : vector<1x8x128xf32> to vector<8x128xf32>
    %26 = vector.shape_cast %23 : vector<8x128xf32> to vector<1x8x128xf32>
    tpu.vector_store %arg4[%c0_12, %c0_13, %c128], %26 {strides = array<i32>} : memref<8x8x256xf32, #tpu.memory_space<vmem>>, vector<1x8x128xf32>,
    %cst_14 = arith.constant dense<0.000000e+00> : vector<8x256xf32>
    %27 = tpu.matmul %9, %3, %cst_14 {dimension_numbers = #tpu.dot_dimension_numbers<[1], [0], [0], [1], [0, 0, 1, 1], [], []>} : vector<8x128xf32>, vector<128x256xf32>, vector<8x256xf32> -> vector<8x256xf32>
    %c1 = arith.constant 1 : index
    %c0_15 = arith.constant 0 : index
    %c0_16 = arith.constant 0 : index
    %28 = vector.load %arg2[%c1, %c0_15, %c0_16] : memref<8x8x256xf32, #tpu.memory_space<vmem>>, vector<1x8x256xf32>
    %29 = vector.shape_cast %28 : vector<1x8x256xf32> to vector<8x256xf32>
    %30 = arith.addf %27, %29 : vector<8x256xf32>
    %31 = vector.extract_strided_slice %30 {offsets = [0, 0], sizes = [8, 128], strides = [1, 1]} : vector<8x256xf32> to vector<8x128xf32>
    %32 = vector.extract_strided_slice %30 {offsets = [0, 128], sizes = [8, 128], strides = [1, 1]} : vector<8x256xf32> to vector<8x128xf32>
    %cst_17 = arith.constant dense<0xFF800000> : vector<8xf32>
    %33 = vector.multi_reduction <maximumf>, %32, %cst_17 [1] : vector<8x128xf32> to vector<8xf32>
    %34 = vector.shape_cast %33 : vector<8xf32> to vector<8x1xf32>
    %35 = vector.broadcast %34 : vector<8x1xf32> to vector<8x128xf32>
    %36 = arith.subf %32, %35 : vector<8x128xf32>
    %37 = math.exp %36 : vector<8x128xf32>
    %cst_18 = arith.constant dense<0.000000e+00> : vector<8xf32>
    %38 = vector.multi_reduction <add>, %37, %cst_18 [1] : vector<8x128xf32> to vector<8xf32>
    %39 = vector.shape_cast %38 : vector<8xf32> to vector<8x1xf32>
    %40 = math.log %39 : vector<8x1xf32>
    %c1_19 = arith.constant 1 : index
    %c0_20 = arith.constant 0 : index
    %c0_21 = arith.constant 0 : index
    %41 = vector.load %arg4[%c1_19, %c0_20, %c0_21] : memref<8x8x256xf32, #tpu.memory_space<vmem>>, vector<1x8x128xf32>
    %42 = vector.shape_cast %41 : vector<1x8x128xf32> to vector<8x128xf32>
    %43 = vector.shape_cast %31 : vector<8x128xf32> to vector<1x8x128xf32>
    tpu.vector_store %arg4[%c1_19, %c0_20, %c0_21], %43 {strides = array<i32>} : memref<8x8x256xf32, #tpu.memory_space<vmem>>, vector<1x8x128xf32>,
    %44 = vector.broadcast %40 : vector<8x1xf32> to vector<8x128xf32>
    %45 = arith.subf %36, %44 : vector<8x128xf32>
    %c1_22 = arith.constant 1 : index
    %c0_23 = arith.constant 0 : index
    %c128_24 = arith.constant 128 : index
    %46 = vector.load %arg4[%c1_22, %c0_23, %c128_24] : memref<8x8x256xf32, #tpu.memory_space<vmem>>, vector<1x8x128xf32>
    %47 = vector.shape_cast %46 : vector<1x8x128xf32> to vector<8x128xf32>
    %48 = vector.shape_cast %45 : vector<8x128xf32> to vector<1x8x128xf32>
    tpu.vector_store %arg4[%c1_22, %c0_23, %c128_24], %48 {strides = array<i32>} : memref<8x8x256xf32, #tpu.memory_space<vmem>>, vector<1x8x128xf32>,
    %cst_25 = arith.constant dense<0.000000e+00> : vector<8x256xf32>
    %49 = tpu.matmul %31, %3, %cst_25 {dimension_numbers = #tpu.dot_dimension_numbers<[1], [0], [0], [1], [0, 0, 1, 1], [], []>} : vector<8x128xf32>, vector<128x256xf32>, vector<8x256xf32> -> vector<8x256xf32>
    %c2 = arith.constant 2 : index
    %c0_26 = arith.constant 0 : index
    %c0_27 = arith.constant 0 : index
    %50 = vector.load %arg2[%c2, %c0_26, %c0_27] : memref<8x8x256xf32, #tpu.memory_space<vmem>>, vector<1x8x256xf32>
    %51 = vector.shape_cast %50 : vector<1x8x256xf32> to vector<8x256xf32>
    %52 = arith.addf %49, %51 : vector<8x256xf32>
    %53 = vector.extract_strided_slice %52 {offsets = [0, 0], sizes = [8, 128], strides = [1, 1]} : vector<8x256xf32> to vector<8x128xf32>
    %54 = vector.extract_strided_slice %52 {offsets = [0, 128], sizes = [8, 128], strides = [1, 1]} : vector<8x256xf32> to vector<8x128xf32>
    %cst_28 = arith.constant dense<0xFF800000> : vector<8xf32>
    %55 = vector.multi_reduction <maximumf>, %54, %cst_28 [1] : vector<8x128xf32> to vector<8xf32>
    %56 = vector.shape_cast %55 : vector<8xf32> to vector<8x1xf32>
    %57 = vector.broadcast %56 : vector<8x1xf32> to vector<8x128xf32>
    %58 = arith.subf %54, %57 : vector<8x128xf32>
    %59 = math.exp %58 : vector<8x128xf32>
    %cst_29 = arith.constant dense<0.000000e+00> : vector<8xf32>
    %60 = vector.multi_reduction <add>, %59, %cst_29 [1] : vector<8x128xf32> to vector<8xf32>
    %61 = vector.shape_cast %60 : vector<8xf32> to vector<8x1xf32>
    %62 = math.log %61 : vector<8x1xf32>
    %c2_30 = arith.constant 2 : index
    %c0_31 = arith.constant 0 : index
    %c0_32 = arith.constant 0 : index
    %63 = vector.load %arg4[%c2_30, %c0_31, %c0_32] : memref<8x8x256xf32, #tpu.memory_space<vmem>>, vector<1x8x128xf32>
    %64 = vector.shape_cast %63 : vector<1x8x128xf32> to vector<8x128xf32>
    %65 = vector.shape_cast %53 : vector<8x128xf32> to vector<1x8x128xf32>
    tpu.vector_store %arg4[%c2_30, %c0_31, %c0_32], %65 {strides = array<i32>} : memref<8x8x256xf32, #tpu.memory_space<vmem>>, vector<1x8x128xf32>,
    %66 = vector.broadcast %62 : vector<8x1xf32> to vector<8x128xf32>
    %67 = arith.subf %58, %66 : vector<8x128xf32>
    %c2_33 = arith.constant 2 : index
    %c0_34 = arith.constant 0 : index
    %c128_35 = arith.constant 128 : index
    %68 = vector.load %arg4[%c2_33, %c0_34, %c128_35] : memref<8x8x256xf32, #tpu.memory_space<vmem>>, vector<1x8x128xf32>
    %69 = vector.shape_cast %68 : vector<1x8x128xf32> to vector<8x128xf32>
    %70 = vector.shape_cast %67 : vector<8x128xf32> to vector<1x8x128xf32>
    tpu.vector_store %arg4[%c2_33, %c0_34, %c128_35], %70 {strides = array<i32>} : memref<8x8x256xf32, #tpu.memory_space<vmem>>, vector<1x8x128xf32>,
    %cst_36 = arith.constant dense<0.000000e+00> : vector<8x256xf32>
    %71 = tpu.matmul %53, %3, %cst_36 {dimension_numbers = #tpu.dot_dimension_numbers<[1], [0], [0], [1], [0, 0, 1, 1], [], []>} : vector<8x128xf32>, vector<128x256xf32>, vector<8x256xf32> -> vector<8x256xf32>
    %c3 = arith.constant 3 : index
    %c0_37 = arith.constant 0 : index
    %c0_38 = arith.constant 0 : index
    %72 = vector.load %arg2[%c3, %c0_37, %c0_38] : memref<8x8x256xf32, #tpu.memory_space<vmem>>, vector<1x8x256xf32>
    %73 = vector.shape_cast %72 : vector<1x8x256xf32> to vector<8x256xf32>
    %74 = arith.addf %71, %73 : vector<8x256xf32>
    %75 = vector.extract_strided_slice %74 {offsets = [0, 0], sizes = [8, 128], strides = [1, 1]} : vector<8x256xf32> to vector<8x128xf32>
    %76 = vector.extract_strided_slice %74 {offsets = [0, 128], sizes = [8, 128], strides = [1, 1]} : vector<8x256xf32> to vector<8x128xf32>
    %cst_39 = arith.constant dense<0xFF800000> : vector<8xf32>
    %77 = vector.multi_reduction <maximumf>, %76, %cst_39 [1] : vector<8x128xf32> to vector<8xf32>
    %78 = vector.shape_cast %77 : vector<8xf32> to vector<8x1xf32>
    %79 = vector.broadcast %78 : vector<8x1xf32> to vector<8x128xf32>
    %80 = arith.subf %76, %79 : vector<8x128xf32>
    %81 = math.exp %80 : vector<8x128xf32>
    %cst_40 = arith.constant dense<0.000000e+00> : vector<8xf32>
    %82 = vector.multi_reduction <add>, %81, %cst_40 [1] : vector<8x128xf32> to vector<8xf32>
    %83 = vector.shape_cast %82 : vector<8xf32> to vector<8x1xf32>
    %84 = math.log %83 : vector<8x1xf32>
    %c3_41 = arith.constant 3 : index
    %c0_42 = arith.constant 0 : index
    %c0_43 = arith.constant 0 : index
    %85 = vector.load %arg4[%c3_41, %c0_42, %c0_43] : memref<8x8x256xf32, #tpu.memory_space<vmem>>, vector<1x8x128xf32>
    %86 = vector.shape_cast %85 : vector<1x8x128xf32> to vector<8x128xf32>
    %87 = vector.shape_cast %75 : vector<8x128xf32> to vector<1x8x128xf32>
    tpu.vector_store %arg4[%c3_41, %c0_42, %c0_43], %87 {strides = array<i32>} : memref<8x8x256xf32, #tpu.memory_space<vmem>>, vector<1x8x128xf32>,
    %88 = vector.broadcast %84 : vector<8x1xf32> to vector<8x128xf32>
    %89 = arith.subf %80, %88 : vector<8x128xf32>
    %c3_44 = arith.constant 3 : index
    %c0_45 = arith.constant 0 : index
    %c128_46 = arith.constant 128 : index
    %90 = vector.load %arg4[%c3_44, %c0_45, %c128_46] : memref<8x8x256xf32, #tpu.memory_space<vmem>>, vector<1x8x128xf32>
    %91 = vector.shape_cast %90 : vector<1x8x128xf32> to vector<8x128xf32>
    %92 = vector.shape_cast %89 : vector<8x128xf32> to vector<1x8x128xf32>
    tpu.vector_store %arg4[%c3_44, %c0_45, %c128_46], %92 {strides = array<i32>} : memref<8x8x256xf32, #tpu.memory_space<vmem>>, vector<1x8x128xf32>,
    %cst_47 = arith.constant dense<0.000000e+00> : vector<8x256xf32>
    %93 = tpu.matmul %75, %3, %cst_47 {dimension_numbers = #tpu.dot_dimension_numbers<[1], [0], [0], [1], [0, 0, 1, 1], [], []>} : vector<8x128xf32>, vector<128x256xf32>, vector<8x256xf32> -> vector<8x256xf32>
    %c4 = arith.constant 4 : index
    %c0_48 = arith.constant 0 : index
    %c0_49 = arith.constant 0 : index
    %94 = vector.load %arg2[%c4, %c0_48, %c0_49] : memref<8x8x256xf32, #tpu.memory_space<vmem>>, vector<1x8x256xf32>
    %95 = vector.shape_cast %94 : vector<1x8x256xf32> to vector<8x256xf32>
    %96 = arith.addf %93, %95 : vector<8x256xf32>
    %97 = vector.extract_strided_slice %96 {offsets = [0, 0], sizes = [8, 128], strides = [1, 1]} : vector<8x256xf32> to vector<8x128xf32>
    %98 = vector.extract_strided_slice %96 {offsets = [0, 128], sizes = [8, 128], strides = [1, 1]} : vector<8x256xf32> to vector<8x128xf32>
    %cst_50 = arith.constant dense<0xFF800000> : vector<8xf32>
    %99 = vector.multi_reduction <maximumf>, %98, %cst_50 [1] : vector<8x128xf32> to vector<8xf32>
    %100 = vector.shape_cast %99 : vector<8xf32> to vector<8x1xf32>
    %101 = vector.broadcast %100 : vector<8x1xf32> to vector<8x128xf32>
    %102 = arith.subf %98, %101 : vector<8x128xf32>
    %103 = math.exp %102 : vector<8x128xf32>
    %cst_51 = arith.constant dense<0.000000e+00> : vector<8xf32>
    %104 = vector.multi_reduction <add>, %103, %cst_51 [1] : vector<8x128xf32> to vector<8xf32>
    %105 = vector.shape_cast %104 : vector<8xf32> to vector<8x1xf32>
    %106 = math.log %105 : vector<8x1xf32>
    %c4_52 = arith.constant 4 : index
    %c0_53 = arith.constant 0 : index
    %c0_54 = arith.constant 0 : index
    %107 = vector.load %arg4[%c4_52, %c0_53, %c0_54] : memref<8x8x256xf32, #tpu.memory_space<vmem>>, vector<1x8x128xf32>
    %108 = vector.shape_cast %107 : vector<1x8x128xf32> to vector<8x128xf32>
    %109 = vector.shape_cast %97 : vector<8x128xf32> to vector<1x8x128xf32>
    tpu.vector_store %arg4[%c4_52, %c0_53, %c0_54], %109 {strides = array<i32>} : memref<8x8x256xf32, #tpu.memory_space<vmem>>, vector<1x8x128xf32>,
    %110 = vector.broadcast %106 : vector<8x1xf32> to vector<8x128xf32>
    %111 = arith.subf %102, %110 : vector<8x128xf32>
    %c4_55 = arith.constant 4 : index
    %c0_56 = arith.constant 0 : index
    %c128_57 = arith.constant 128 : index
    %112 = vector.load %arg4[%c4_55, %c0_56, %c128_57] : memref<8x8x256xf32, #tpu.memory_space<vmem>>, vector<1x8x128xf32>
    %113 = vector.shape_cast %112 : vector<1x8x128xf32> to vector<8x128xf32>
    %114 = vector.shape_cast %111 : vector<8x128xf32> to vector<1x8x128xf32>
    tpu.vector_store %arg4[%c4_55, %c0_56, %c128_57], %114 {strides = array<i32>} : memref<8x8x256xf32, #tpu.memory_space<vmem>>, vector<1x8x128xf32>,
    %cst_58 = arith.constant dense<0.000000e+00> : vector<8x256xf32>
    %115 = tpu.matmul %97, %3, %cst_58 {dimension_numbers = #tpu.dot_dimension_numbers<[1], [0], [0], [1], [0, 0, 1, 1], [], []>} : vector<8x128xf32>, vector<128x256xf32>, vector<8x256xf32> -> vector<8x256xf32>
    %c5 = arith.constant 5 : index
    %c0_59 = arith.constant 0 : index
    %c0_60 = arith.constant 0 : index
    %116 = vector.load %arg2[%c5, %c0_59, %c0_60] : memref<8x8x256xf32, #tpu.memory_space<vmem>>, vector<1x8x256xf32>
    %117 = vector.shape_cast %116 : vector<1x8x256xf32> to vector<8x256xf32>
    %118 = arith.addf %115, %117 : vector<8x256xf32>
    %119 = vector.extract_strided_slice %118 {offsets = [0, 0], sizes = [8, 128], strides = [1, 1]} : vector<8x256xf32> to vector<8x128xf32>
    %120 = vector.extract_strided_slice %118 {offsets = [0, 128], sizes = [8, 128], strides = [1, 1]} : vector<8x256xf32> to vector<8x128xf32>
    %cst_61 = arith.constant dense<0xFF800000> : vector<8xf32>
    %121 = vector.multi_reduction <maximumf>, %120, %cst_61 [1] : vector<8x128xf32> to vector<8xf32>
    %122 = vector.shape_cast %121 : vector<8xf32> to vector<8x1xf32>
    %123 = vector.broadcast %122 : vector<8x1xf32> to vector<8x128xf32>
    %124 = arith.subf %120, %123 : vector<8x128xf32>
    %125 = math.exp %124 : vector<8x128xf32>
    %cst_62 = arith.constant dense<0.000000e+00> : vector<8xf32>
    %126 = vector.multi_reduction <add>, %125, %cst_62 [1] : vector<8x128xf32> to vector<8xf32>
    %127 = vector.shape_cast %126 : vector<8xf32> to vector<8x1xf32>
    %128 = math.log %127 : vector<8x1xf32>
    %c5_63 = arith.constant 5 : index
    %c0_64 = arith.constant 0 : index
    %c0_65 = arith.constant 0 : index
    %129 = vector.load %arg4[%c5_63, %c0_64, %c0_65] : memref<8x8x256xf32, #tpu.memory_space<vmem>>, vector<1x8x128xf32>
    %130 = vector.shape_cast %129 : vector<1x8x128xf32> to vector<8x128xf32>
    %131 = vector.shape_cast %119 : vector<8x128xf32> to vector<1x8x128xf32>
    tpu.vector_store %arg4[%c5_63, %c0_64, %c0_65], %131 {strides = array<i32>} : memref<8x8x256xf32, #tpu.memory_space<vmem>>, vector<1x8x128xf32>,
    %132 = vector.broadcast %128 : vector<8x1xf32> to vector<8x128xf32>
    %133 = arith.subf %124, %132 : vector<8x128xf32>
    %c5_66 = arith.constant 5 : index
    %c0_67 = arith.constant 0 : index
    %c128_68 = arith.constant 128 : index
    %134 = vector.load %arg4[%c5_66, %c0_67, %c128_68] : memref<8x8x256xf32, #tpu.memory_space<vmem>>, vector<1x8x128xf32>
    %135 = vector.shape_cast %134 : vector<1x8x128xf32> to vector<8x128xf32>
    %136 = vector.shape_cast %133 : vector<8x128xf32> to vector<1x8x128xf32>
    tpu.vector_store %arg4[%c5_66, %c0_67, %c128_68], %136 {strides = array<i32>} : memref<8x8x256xf32, #tpu.memory_space<vmem>>, vector<1x8x128xf32>,
    %cst_69 = arith.constant dense<0.000000e+00> : vector<8x256xf32>
    %137 = tpu.matmul %119, %3, %cst_69 {dimension_numbers = #tpu.dot_dimension_numbers<[1], [0], [0], [1], [0, 0, 1, 1], [], []>} : vector<8x128xf32>, vector<128x256xf32>, vector<8x256xf32> -> vector<8x256xf32>
    %c6 = arith.constant 6 : index
    %c0_70 = arith.constant 0 : index
    %c0_71 = arith.constant 0 : index
    %138 = vector.load %arg2[%c6, %c0_70, %c0_71] : memref<8x8x256xf32, #tpu.memory_space<vmem>>, vector<1x8x256xf32>
    %139 = vector.shape_cast %138 : vector<1x8x256xf32> to vector<8x256xf32>
    %140 = arith.addf %137, %139 : vector<8x256xf32>
    %141 = vector.extract_strided_slice %140 {offsets = [0, 0], sizes = [8, 128], strides = [1, 1]} : vector<8x256xf32> to vector<8x128xf32>
    %142 = vector.extract_strided_slice %140 {offsets = [0, 128], sizes = [8, 128], strides = [1, 1]} : vector<8x256xf32> to vector<8x128xf32>
    %cst_72 = arith.constant dense<0xFF800000> : vector<8xf32>
    %143 = vector.multi_reduction <maximumf>, %142, %cst_72 [1] : vector<8x128xf32> to vector<8xf32>
    %144 = vector.shape_cast %143 : vector<8xf32> to vector<8x1xf32>
    %145 = vector.broadcast %144 : vector<8x1xf32> to vector<8x128xf32>
    %146 = arith.subf %142, %145 : vector<8x128xf32>
    %147 = math.exp %146 : vector<8x128xf32>
    %cst_73 = arith.constant dense<0.000000e+00> : vector<8xf32>
    %148 = vector.multi_reduction <add>, %147, %cst_73 [1] : vector<8x128xf32> to vector<8xf32>
    %149 = vector.shape_cast %148 : vector<8xf32> to vector<8x1xf32>
    %150 = math.log %149 : vector<8x1xf32>
    %c6_74 = arith.constant 6 : index
    %c0_75 = arith.constant 0 : index
    %c0_76 = arith.constant 0 : index
    %151 = vector.load %arg4[%c6_74, %c0_75, %c0_76] : memref<8x8x256xf32, #tpu.memory_space<vmem>>, vector<1x8x128xf32>
    %152 = vector.shape_cast %151 : vector<1x8x128xf32> to vector<8x128xf32>
    %153 = vector.shape_cast %141 : vector<8x128xf32> to vector<1x8x128xf32>
    tpu.vector_store %arg4[%c6_74, %c0_75, %c0_76], %153 {strides = array<i32>} : memref<8x8x256xf32, #tpu.memory_space<vmem>>, vector<1x8x128xf32>,
    %154 = vector.broadcast %150 : vector<8x1xf32> to vector<8x128xf32>
    %155 = arith.subf %146, %154 : vector<8x128xf32>
    %c6_77 = arith.constant 6 : index
    %c0_78 = arith.constant 0 : index
    %c128_79 = arith.constant 128 : index
    %156 = vector.load %arg4[%c6_77, %c0_78, %c128_79] : memref<8x8x256xf32, #tpu.memory_space<vmem>>, vector<1x8x128xf32>
    %157 = vector.shape_cast %156 : vector<1x8x128xf32> to vector<8x128xf32>
    %158 = vector.shape_cast %155 : vector<8x128xf32> to vector<1x8x128xf32>
    tpu.vector_store %arg4[%c6_77, %c0_78, %c128_79], %158 {strides = array<i32>} : memref<8x8x256xf32, #tpu.memory_space<vmem>>, vector<1x8x128xf32>,
    %cst_80 = arith.constant dense<0.000000e+00> : vector<8x256xf32>
    %159 = tpu.matmul %141, %3, %cst_80 {dimension_numbers = #tpu.dot_dimension_numbers<[1], [0], [0], [1], [0, 0, 1, 1], [], []>} : vector<8x128xf32>, vector<128x256xf32>, vector<8x256xf32> -> vector<8x256xf32>
    %c7 = arith.constant 7 : index
    %c0_81 = arith.constant 0 : index
    %c0_82 = arith.constant 0 : index
    %160 = vector.load %arg2[%c7, %c0_81, %c0_82] : memref<8x8x256xf32, #tpu.memory_space<vmem>>, vector<1x8x256xf32>
    %161 = vector.shape_cast %160 : vector<1x8x256xf32> to vector<8x256xf32>
    %162 = arith.addf %159, %161 : vector<8x256xf32>
    %163 = vector.extract_strided_slice %162 {offsets = [0, 0], sizes = [8, 128], strides = [1, 1]} : vector<8x256xf32> to vector<8x128xf32>
    %164 = vector.extract_strided_slice %162 {offsets = [0, 128], sizes = [8, 128], strides = [1, 1]} : vector<8x256xf32> to vector<8x128xf32>
    %cst_83 = arith.constant dense<0xFF800000> : vector<8xf32>
    %165 = vector.multi_reduction <maximumf>, %164, %cst_83 [1] : vector<8x128xf32> to vector<8xf32>
    %166 = vector.shape_cast %165 : vector<8xf32> to vector<8x1xf32>
    %167 = vector.broadcast %166 : vector<8x1xf32> to vector<8x128xf32>
    %168 = arith.subf %164, %167 : vector<8x128xf32>
    %169 = math.exp %168 : vector<8x128xf32>
    %cst_84 = arith.constant dense<0.000000e+00> : vector<8xf32>
    %170 = vector.multi_reduction <add>, %169, %cst_84 [1] : vector<8x128xf32> to vector<8xf32>
    %171 = vector.shape_cast %170 : vector<8xf32> to vector<8x1xf32>
    %172 = math.log %171 : vector<8x1xf32>
    %c7_85 = arith.constant 7 : index
    %c0_86 = arith.constant 0 : index
    %c0_87 = arith.constant 0 : index
    %173 = vector.load %arg4[%c7_85, %c0_86, %c0_87] : memref<8x8x256xf32, #tpu.memory_space<vmem>>, vector<1x8x128xf32>
    %174 = vector.shape_cast %173 : vector<1x8x128xf32> to vector<8x128xf32>
    %175 = vector.shape_cast %163 : vector<8x128xf32> to vector<1x8x128xf32>
    tpu.vector_store %arg4[%c7_85, %c0_86, %c0_87], %175 {strides = array<i32>} : memref<8x8x256xf32, #tpu.memory_space<vmem>>, vector<1x8x128xf32>,
    %176 = vector.broadcast %172 : vector<8x1xf32> to vector<8x128xf32>
    %177 = arith.subf %168, %176 : vector<8x128xf32>
    %c7_88 = arith.constant 7 : index
    %c0_89 = arith.constant 0 : index
    %c128_90 = arith.constant 128 : index
    %178 = vector.load %arg4[%c7_88, %c0_89, %c128_90] : memref<8x8x256xf32, #tpu.memory_space<vmem>>, vector<1x8x128xf32>
    %179 = vector.shape_cast %178 : vector<1x8x128xf32> to vector<8x128xf32>
    %180 = vector.shape_cast %177 : vector<8x128xf32> to vector<1x8x128xf32>
    tpu.vector_store %arg4[%c7_88, %c0_89, %c128_90], %180 {strides = array<i32>} : memref<8x8x256xf32, #tpu.memory_space<vmem>>, vector<1x8x128xf32>,
    %c0_91 = arith.constant 0 : index
    %c0_92 = arith.constant 0 : index
    %181 = vector.load %arg5[%c0_91, %c0_92] : memref<8x128xf32, #tpu.memory_space<vmem>>, vector<8x128xf32>
    tpu.vector_store %arg5[%c0_91, %c0_92], %163 {strides = array<i32>} : memref<8x128xf32, #tpu.memory_space<vmem>>, vector<8x128xf32>,
    return
  }
  func.func @transform_0(%arg0: i32) -> (i32, i32) {
    %c0_i32 = arith.constant 0 : i32
    %c0_i32_0 = arith.constant 0 : i32
    %c0_i32_1 = arith.constant 0 : i32
    return %c0_i32, %c0_i32_0 : i32, i32
  }
  func.func @transform_1(%arg0: i32) -> (i32, i32, i32) {
    %c0_i32 = arith.constant 0 : i32
    %c0_i32_0 = arith.constant 0 : i32
    %c0_i32_1 = arith.constant 0 : i32
    return %arg0, %c0_i32, %c0_i32_0 : i32, i32, i32
  }
  func.func @transform_2(%arg0: i32) -> (i32, i32) {
    %c0_i32 = arith.constant 0 : i32
    %c0_i32_0 = arith.constant 0 : i32
    %c0_i32_1 = arith.constant 0 : i32
    return %c0_i32, %c0_i32_0 : i32, i32
  }
  func.func @transform_3(%arg0: i32) -> (i32, i32, i32) {
    %c0_i32 = arith.constant 0 : i32
    %c0_i32_0 = arith.constant 0 : i32
    %c0_i32_1 = arith.constant 0 : i32
    return %arg0, %c0_i32, %c0_i32_0 : i32, i32, i32
  }
}

</mosaic_0001>

<llo_original>
// kernel: rnn_sequence.1
$region0: #{rnn_sequence.1}
  #allocation0 [shape = 'u32[]', space=smem, size = 0x4, offset = 0x4, fixed_abs, tag = 'smem constant byte address 0x4 - core index']
  #allocation1 [shape = 'u32[144,128]{1,0:T(1,128)}', space=vmem, size = 0x12000, scoped, tag = 'internal scratch']
  #allocation2 [shape = 'f32[8,128]{1,0:T(8,128)}', space=vmem, size = 0x1000, scoped, tag = 'scratch operand']
  %s0 = inlined_call_operand.vmem [shape: f32[8,128], index: 0, kind: input, shape index: {}]
  %s1 = inlined_call_operand.vmem [shape: f32[8,8,256], index: 1, kind: input, shape index: {}]
  %s2 = inlined_call_operand.vmem [shape: f32[128,256], index: 2, kind: input, shape index: {}]
  %s3 = inlined_call_operand.vmem [shape: f32[8,8,256], index: 3, kind: output, shape index: {}]
  %s4 = sld [smem:[#allocation0]]
  $region26: #{rnn_sequence.1} parent=0
    _
  %s6 = ssub.s32 1, %s4
  %s7 = scalar_select 0, %s6, %s4
  // Predicated region
  $region2: #{rnn_sequence.1} parent=0 // pred_check
    _
  $region3: #{rnn_sequence.1} parent=0 // pred_check_branch
    %9 = sbr.rel (0) target = $region5
  $region4: #{rnn_sequence.1} parent=0 // pred_region
    _
  $region5: #{rnn_sequence.1} parent=0 // pred_fallthru
    _
  // Predicated region
  $region6: #{rnn_sequence.1} parent=0 // pred_check
    _
  $region7: #{rnn_sequence.1} parent=0 // pred_check_branch
    %11 = sbr.rel (0) target = $region9
  $region8: #{rnn_sequence.1} parent=0 // pred_region
    _
  $region9: #{rnn_sequence.1} parent=0 // pred_fallthru
    _
  // Predicated region
  $region10: #{rnn_sequence.1} parent=0 // pred_check
    _
  $region11: #{rnn_sequence.1} parent=0 // pred_check_branch
    %13 = sbr.rel (0) target = $region13
  $region12: #{rnn_sequence.1} parent=0 // pred_region
    _
  $region13: #{rnn_sequence.1} parent=0 // pred_fallthru
    _
  %p14 = scmp.eq.s32.totalorder 0, 0
  // Predicated region
  $region14: #{rnn_sequence.1} parent=0 // pred_check
    %p15 = pneg %p14
  $region15: #{rnn_sequence.1} parent=0 // pred_check_branch
    %17 = sbr.rel (%p15) target = $region17
  $region16: #{rnn_sequence.1} parent=0 // pred_region
    %v18 = vld [vmem:[%s0] sm:$0xff]
    %19 = vst [vmem:[#allocation2] sm:$0xff] %v18
  $region17: #{rnn_sequence.1} parent=0 // pred_fallthru
    _
  %v20 = vld [vmem:[%s2] sm:$0xff]
  %v21 = vld [vmem:[%s2 + $0x8] sm:$0xff]
  %v22 = vld [vmem:[%s2 + $0x10] sm:$0xff]
  %v23 = vld [vmem:[%s2 + $0x18] sm:$0xff]
  %v24 = vld [vmem:[%s2 + $0x20] sm:$0xff]
  %v25 = vld [vmem:[%s2 + $0x28] sm:$0xff]
  %v26 = vld [vmem:[%s2 + $0x30] sm:$0xff]
  %v27 = vld [vmem:[%s2 + $0x38] sm:$0xff]
  %v28 = vld [vmem:[%s2 + $0x40] sm:$0xff]
  %v29 = vld [vmem:[%s2 + $0x48] sm:$0xff]
  %v30 = vld [vmem:[%s2 + $0x50] sm:$0xff]
  %v31 = vld [vmem:[%s2 + $0x58] sm:$0xff]
  %v32 = vld [vmem:[%s2 + $0x60] sm:$0xff]
  %v33 = vld [vmem:[%s2 + $0x68] sm:$0xff]
  %v34 = vld [vmem:[%s2 + $0x70] sm:$0xff]
  %v35 = vld [vmem:[%s2 + $0x78] sm:$0xff]
  %v36 = vld [vmem:[%s2 + $0x80] sm:$0xff]
  %v37 = vld [vmem:[%s2 + $0x88] sm:$0xff]
  %v38 = vld [vmem:[%s2 + $0x90] sm:$0xff]
  %v39 = vld [vmem:[%s2 + $0x98] sm:$0xff]
  %v40 = vld [vmem:[%s2 + $0xa0] sm:$0xff]
  %v41 = vld [vmem:[%s2 + $0xa8] sm:$0xff]
  %v42 = vld [vmem:[%s2 + $0xb0] sm:$0xff]
  %v43 = vld [vmem:[%s2 + $0xb8] sm:$0xff]
  %v44 = vld [vmem:[%s2 + $0xc0] sm:$0xff]
  %v45 = vld [vmem:[%s2 + $0xc8] sm:$0xff]
  %v46 = vld [vmem:[%s2 + $0xd0] sm:$0xff]
  %v47 = vld [vmem:[%s2 + $0xd8] sm:$0xff]
  %v48 = vld [vmem:[%s2 + $0xe0] sm:$0xff]
  %v49 = vld [vmem:[%s2 + $0xe8] sm:$0xff]
  %v50 = vld [vmem:[%s2 + $0xf0] sm:$0xff]
  %v51 = vld [vmem:[%s2 + $0xf8] sm:$0xff]
  %v52 = vld [vmem:[#allocation2] sm:$0xff]
  %v53 = vld [vmem:[%s1] sm:$0xff]
  %v54 = vld [vmem:[%s1 + $0x8] sm:$0xff]
  %55 = vmatprep.subr.mxu0 %v21
  %56 = vmatpush1.msra.mxu0 %v20
  %57 = vmatprep.subr.mxu0 %v23
  %58 = vmatpush1.msra.mxu0 %v22
  %59 = vmatprep.subr.mxu0 %v25
  %60 = vmatpush1.msra.mxu0 %v24
  %61 = vmatprep.subr.mxu0 %v27
  %62 = vmatpush1.msra.mxu0 %v26
  %63 = vmatprep.subr.mxu0 %v29
  %64 = vmatpush1.msra.mxu0 %v28
  %65 = vmatprep.subr.mxu0 %v31
  %66 = vmatpush1.msra.mxu0 %v30
  %67 = vmatprep.subr.mxu0 %v33
  %68 = vmatpush1.msra.mxu0 %v32
  %69 = vmatprep.subr.mxu0 %v35
  %70 = vmatpush1.msra.mxu0 %v34
  %71 = vmatprep.subr.mxu0 %v37
  %72 = vmatpush1.msra.mxu0 %v36
  %73 = vmatprep.subr.mxu0 %v39
  %74 = vmatpush1.msra.mxu0 %v38
  %75 = vmatprep.subr.mxu0 %v41
  %76 = vmatpush1.msra.mxu0 %v40
  %77 = vmatprep.subr.mxu0 %v43
  %78 = vmatpush1.msra.mxu0 %v42
  %79 = vmatprep.subr.mxu0 %v45
  %80 = vmatpush1.msra.mxu0 %v44
  %81 = vmatprep.subr.mxu0 %v47
  %82 = vmatpush1.msra.mxu0 %v46
  %83 = vmatprep.subr.mxu0 %v49
  %84 = vmatpush1.msra.mxu0 %v48
  %85 = vmatprep.subr.mxu0 %v51
  %86 = vmatpush1.msra.mxu0 %v50
  %87 = vmatprep.subr.mxu0 0.0
  %88 = vmatpush1.msra.mxu0 0.0
  %89 = vmatprep.subr.mxu0 0.0
  %90 = vmatpush1.msra.mxu0 0.0
  %91 = vmatprep.subr.mxu0 0.0
  %92 = vmatpush1.msra.mxu0 0.0
  %93 = vmatprep.subr.mxu0 0.0
  %94 = vmatpush1.msra.mxu0 0.0
  %95 = vmatprep.subr.mxu0 0.0
  %96 = vmatpush1.msra.mxu0 0.0
  %97 = vmatprep.subr.mxu0 0.0
  %98 = vmatpush1.msra.mxu0 0.0
  %99 = vmatprep.subr.mxu0 0.0
  %100 = vmatpush1.msra.mxu0 0.0
  %101 = vmatprep.subr.mxu0 0.0
  %102 = vmatpush1.msra.mxu0 0.0
  %103 = vmatprep.subr.mxu0 0.0
  %104 = vmatpush1.msra.mxu0 0.0
  %105 = vmatprep.subr.mxu0 0.0
  %106 = vmatpush1.msra.mxu0 0.0
  %107 = vmatprep.subr.mxu0 0.0
  %108 = vmatpush1.msra.mxu0 0.0
  %109 = vmatprep.subr.mxu0 0.0
  %110 = vmatpush1.msra.mxu0 0.0
  %111 = vmatprep.subr.mxu0 0.0
  %112 = vmatpush1.msra.mxu0 0.0
  %113 = vmatprep.subr.mxu0 0.0
  %114 = vmatpush1.msra.mxu0 0.0
  %115 = vmatprep.subr.mxu0 0.0
  %116 = vmatpush1.msra.mxu0 0.0
  %117 = vmatprep.subr.mxu0 0.0
  %118 = vmatpush1.msra.mxu0 0.0
  %119 = vmatprep.mubr.f32.mxu0 0.0
  %120 = vmatmul.mubr.f32.gmra.mrb[0].mxu0 %v52
  %v121 = vpop.f32.mrb[0].mxu0
  %v122 = vadd.f32 %v53, %v121
  %v123 = vpop.f32.mrb[0].mxu0
  %v124 = vadd.f32 %v54, %v123
  %125 = vdwg.mxu0
  %126 = vmax.xlane.f32.xlu0 %v124
  %v127 = vpop.xlane.xlu0 %126
  %v128 = vsub.f32 %v124, %v127
  %v129 = vmul.f32 %v128, 1.442695
  %v130 = vpow.pop %v129
  %131 = vadd.xlane.f32.xlu0 %v130
  %v132 = vpop.xlane.xlu0 %131
  %v133 = vlog2.pop %v132
  %v134 = vmul.f32 %v133, 0.6931472
  %135 = vst [vmem:[%s3] sm:$0xff] %v122
  %v136 = vsub.f32 %v128, %v134
  %137 = vst [vmem:[%s3 + $0x8] sm:$0xff] %v136
  %s138 = scalar_lea.vmem %s1, 16
  %v139 = vld [vmem:[%s138] sm:$0xff]
  %v140 = vld [vmem:[%s138 + $0x8] sm:$0xff]
  %141 = vmatprep.subr.mxu0 %v21
  %142 = vmatpush1.msra.mxu0 %v20
  %143 = vmatprep.subr.mxu0 %v23
  %144 = vmatpush1.msra.mxu0 %v22
  %145 = vmatprep.subr.mxu0 %v25
  %146 = vmatpush1.msra.mxu0 %v24
  %147 = vmatprep.subr.mxu0 %v27
  %148 = vmatpush1.msra.mxu0 %v26
  %149 = vmatprep.subr.mxu0 %v29
  %150 = vmatpush1.msra.mxu0 %v28
  %151 = vmatprep.subr.mxu0 %v31
  %152 = vmatpush1.msra.mxu0 %v30
  %153 = vmatprep.subr.mxu0 %v33
  %154 = vmatpush1.msra.mxu0 %v32
  %155 = vmatprep.subr.mxu0 %v35
  %156 = vmatpush1.msra.mxu0 %v34
  %157 = vmatprep.subr.mxu0 %v37
  %158 = vmatpush1.msra.mxu0 %v36
  %159 = vmatprep.subr.mxu0 %v39
  %160 = vmatpush1.msra.mxu0 %v38
  %161 = vmatprep.subr.mxu0 %v41
  %162 = vmatpush1.msra.mxu0 %v40
  %163 = vmatprep.subr.mxu0 %v43
  %164 = vmatpush1.msra.mxu0 %v42
  %165 = vmatprep.subr.mxu0 %v45
  %166 = vmatpush1.msra.mxu0 %v44
  %167 = vmatprep.subr.mxu0 %v47
  %168 = vmatpush1.msra.mxu0 %v46
  %169 = vmatprep.subr.mxu0 %v49
  %170 = vmatpush1.msra.mxu0 %v48
  %171 = vmatprep.subr.mxu0 %v51
  %172 = vmatpush1.msra.mxu0 %v50
  %173 = vmatprep.subr.mxu0 0.0
  %174 = vmatpush1.msra.mxu0 0.0
  %175 = vmatprep.subr.mxu0 0.0
  %176 = vmatpush1.msra.mxu0 0.0
  %177 = vmatprep.subr.mxu0 0.0
  %178 = vmatpush1.msra.mxu0 0.0
  %179 = vmatprep.subr.mxu0 0.0
  %180 = vmatpush1.msra.mxu0 0.0
  %181 = vmatprep.subr.mxu0 0.0
  %182 = vmatpush1.msra.mxu0 0.0
  %183 = vmatprep.subr.mxu0 0.0
  %184 = vmatpush1.msra.mxu0 0.0
  %185 = vmatprep.subr.mxu0 0.0
  %186 = vmatpush1.msra.mxu0 0.0
  %187 = vmatprep.subr.mxu0 0.0
  %188 = vmatpush1.msra.mxu0 0.0
  %189 = vmatprep.subr.mxu0 0.0
  %190 = vmatpush1.msra.mxu0 0.0
  %191 = vmatprep.subr.mxu0 0.0
  %192 = vmatpush1.msra.mxu0 0.0
  %193 = vmatprep.subr.mxu0 0.0
  %194 = vmatpush1.msra.mxu0 0.0
  %195 = vmatprep.subr.mxu0 0.0
  %196 = vmatpush1.msra.mxu0 0.0
  %197 = vmatprep.subr.mxu0 0.0
  %198 = vmatpush1.msra.mxu0 0.0
  %199 = vmatprep.subr.mxu0 0.0
  %200 = vmatpush1.msra.mxu0 0.0
  %201 = vmatprep.subr.mxu0 0.0
  %202 = vmatpush1.msra.mxu0 0.0
  %203 = vmatprep.subr.mxu0 0.0
  %204 = vmatpush1.msra.mxu0 0.0
  %205 = vmatprep.mubr.f32.mxu0 0.0
  %206 = vmatmul.mubr.f32.gmra.mrb[0].mxu0 %v122
  %v207 = vpop.f32.mrb[0].mxu0
  %v208 = vadd.f32 %v139, %v207
  %v209 = vpop.f32.mrb[0].mxu0
  %v210 = vadd.f32 %v140, %v209
  %211 = vdwg.mxu0
  %212 = vmax.xlane.f32.xlu0 %v210
  %v213 = vpop.xlane.xlu0 %212
  %v214 = vsub.f32 %v210, %v213
  %v215 = vmul.f32 %v214, 1.442695
  %v216 = vpow.pop %v215
  %217 = vadd.xlane.f32.xlu0 %v216
  %v218 = vpop.xlane.xlu0 %217
  %v219 = vlog2.pop %v218
  %v220 = vmul.f32 %v219, 0.6931472
  %s221 = scalar_lea.vmem %s3, 16
  %222 = vst [vmem:[%s221] sm:$0xff] %v208
  %v223 = vsub.f32 %v214, %v220
  %224 = vst [vmem:[%s221 + $0x8] sm:$0xff] %v223
  %s225 = scalar_lea.vmem %s1, 32
  %v226 = vld [vmem:[%s225] sm:$0xff]
  %v227 = vld [vmem:[%s225 + $0x8] sm:$0xff]
  %228 = vmatprep.subr.mxu0 %v21
  %229 = vmatpush1.msra.mxu0 %v20
  %230 = vmatprep.subr.mxu0 %v23
  %231 = vmatpush1.msra.mxu0 %v22
  %232 = vmatprep.subr.mxu0 %v25
  %233 = vmatpush1.msra.mxu0 %v24
  %234 = vmatprep.subr.mxu0 %v27
  %235 = vmatpush1.msra.mxu0 %v26
  %236 = vmatprep.subr.mxu0 %v29
  %237 = vmatpush1.msra.mxu0 %v28
  %238 = vmatprep.subr.mxu0 %v31
  %239 = vmatpush1.msra.mxu0 %v30
  %240 = vmatprep.subr.mxu0 %v33
  %241 = vmatpush1.msra.mxu0 %v32
  %242 = vmatprep.subr.mxu0 %v35
  %243 = vmatpush1.msra.mxu0 %v34
  %244 = vmatprep.subr.mxu0 %v37
  %245 = vmatpush1.msra.mxu0 %v36
  %246 = vmatprep.subr.mxu0 %v39
  %247 = vmatpush1.msra.mxu0 %v38
  %248 = vmatprep.subr.mxu0 %v41
  %249 = vmatpush1.msra.mxu0 %v40
  %250 = vmatprep.subr.mxu0 %v43
  %251 = vmatpush1.msra.mxu0 %v42
  %252 = vmatprep.subr.mxu0 %v45
  %253 = vmatpush1.msra.mxu0 %v44
  %254 = vmatprep.subr.mxu0 %v47
  %255 = vmatpush1.msra.mxu0 %v46
  %256 = vmatprep.subr.mxu0 %v49
  %257 = vmatpush1.msra.mxu0 %v48
  %258 = vmatprep.subr.mxu0 %v51
  %259 = vmatpush1.msra.mxu0 %v50
  %260 = vmatprep.subr.mxu0 0.0
  %261 = vmatpush1.msra.mxu0 0.0
  %262 = vmatprep.subr.mxu0 0.0
  %263 = vmatpush1.msra.mxu0 0.0
  %264 = vmatprep.subr.mxu0 0.0
  %265 = vmatpush1.msra.mxu0 0.0
  %266 = vmatprep.subr.mxu0 0.0
  %267 = vmatpush1.msra.mxu0 0.0
  %268 = vmatprep.subr.mxu0 0.0
  %269 = vmatpush1.msra.mxu0 0.0
  %270 = vmatprep.subr.mxu0 0.0
  %271 = vmatpush1.msra.mxu0 0.0
  %272 = vmatprep.subr.mxu0 0.0
  %273 = vmatpush1.msra.mxu0 0.0
  %274 = vmatprep.subr.mxu0 0.0
  %275 = vmatpush1.msra.mxu0 0.0
  %276 = vmatprep.subr.mxu0 0.0
  %277 = vmatpush1.msra.mxu0 0.0
  %278 = vmatprep.subr.mxu0 0.0
  %279 = vmatpush1.msra.mxu0 0.0
  %280 = vmatprep.subr.mxu0 0.0
  %281 = vmatpush1.msra.mxu0 0.0
  %282 = vmatprep.subr.mxu0 0.0
  %283 = vmatpush1.msra.mxu0 0.0
  %284 = vmatprep.subr.mxu0 0.0
  %285 = vmatpush1.msra.mxu0 0.0
  %286 = vmatprep.subr.mxu0 0.0
  %287 = vmatpush1.msra.mxu0 0.0
  %288 = vmatprep.subr.mxu0 0.0
  %289 = vmatpush1.msra.mxu0 0.0
  %290 = vmatprep.subr.mxu0 0.0
  %291 = vmatpush1.msra.mxu0 0.0
  %292 = vmatprep.mubr.f32.mxu0 0.0
  %293 = vmatmul.mubr.f32.gmra.mrb[0].mxu0 %v208
  %v294 = vpop.f32.mrb[0].mxu0
  %v295 = vadd.f32 %v226, %v294
  %v296 = vpop.f32.mrb[0].mxu0
  %v297 = vadd.f32 %v227, %v296
  %298 = vdwg.mxu0
  %299 = vmax.xlane.f32.xlu0 %v297
  %v300 = vpop.xlane.xlu0 %299
  %v301 = vsub.f32 %v297, %v300
  %v302 = vmul.f32 %v301, 1.442695
  %v303 = vpow.pop %v302
  %304 = vadd.xlane.f32.xlu0 %v303
  %v305 = vpop.xlane.xlu0 %304
  %v306 = vlog2.pop %v305
  %v307 = vmul.f32 %v306, 0.6931472
  %s308 = scalar_lea.vmem %s3, 32
  %309 = vst [vmem:[%s308] sm:$0xff] %v295
  %v310 = vsub.f32 %v301, %v307
  %311 = vst [vmem:[%s308 + $0x8] sm:$0xff] %v310
  %s312 = scalar_lea.vmem %s1, 48
  %v313 = vld [vmem:[%s312] sm:$0xff]
  %v314 = vld [vmem:[%s312 + $0x8] sm:$0xff]
  %315 = vmatprep.subr.mxu0 %v21
  %316 = vmatpush1.msra.mxu0 %v20
  %317 = vmatprep.subr.mxu0 %v23
  %318 = vmatpush1.msra.mxu0 %v22
  %319 = vmatprep.subr.mxu0 %v25
  %320 = vmatpush1.msra.mxu0 %v24
  %321 = vmatprep.subr.mxu0 %v27
  %322 = vmatpush1.msra.mxu0 %v26
  %323 = vmatprep.subr.mxu0 %v29
  %324 = vmatpush1.msra.mxu0 %v28
  %325 = vmatprep.subr.mxu0 %v31
  %326 = vmatpush1.msra.mxu0 %v30
  %327 = vmatprep.subr.mxu0 %v33
  %328 = vmatpush1.msra.mxu0 %v32
  %329 = vmatprep.subr.mxu0 %v35
  %330 = vmatpush1.msra.mxu0 %v34
  %331 = vmatprep.subr.mxu0 %v37
  %332 = vmatpush1.msra.mxu0 %v36
  %333 = vmatprep.subr.mxu0 %v39
  %334 = vmatpush1.msra.mxu0 %v38
  %335 = vmatprep.subr.mxu0 %v41
  %336 = vmatpush1.msra.mxu0 %v40
  %337 = vmatprep.subr.mxu0 %v43
  %338 = vmatpush1.msra.mxu0 %v42
  %339 = vmatprep.subr.mxu0 %v45
  %340 = vmatpush1.msra.mxu0 %v44
  %341 = vmatprep.subr.mxu0 %v47
  %342 = vmatpush1.msra.mxu0 %v46
  %343 = vmatprep.subr.mxu0 %v49
  %344 = vmatpush1.msra.mxu0 %v48
  %345 = vmatprep.subr.mxu0 %v51
  %346 = vmatpush1.msra.mxu0 %v50
  %347 = vmatprep.subr.mxu0 0.0
  %348 = vmatpush1.msra.mxu0 0.0
  %349 = vmatprep.subr.mxu0 0.0
  %350 = vmatpush1.msra.mxu0 0.0
  %351 = vmatprep.subr.mxu0 0.0
  %352 = vmatpush1.msra.mxu0 0.0
  %353 = vmatprep.subr.mxu0 0.0
  %354 = vmatpush1.msra.mxu0 0.0
  %355 = vmatprep.subr.mxu0 0.0
  %356 = vmatpush1.msra.mxu0 0.0
  %357 = vmatprep.subr.mxu0 0.0
  %358 = vmatpush1.msra.mxu0 0.0
  %359 = vmatprep.subr.mxu0 0.0
  %360 = vmatpush1.msra.mxu0 0.0
  %361 = vmatprep.subr.mxu0 0.0
  %362 = vmatpush1.msra.mxu0 0.0
  %363 = vmatprep.subr.mxu0 0.0
  %364 = vmatpush1.msra.mxu0 0.0
  %365 = vmatprep.subr.mxu0 0.0
  %366 = vmatpush1.msra.mxu0 0.0
  %367 = vmatprep.subr.mxu0 0.0
  %368 = vmatpush1.msra.mxu0 0.0
  %369 = vmatprep.subr.mxu0 0.0
  %370 = vmatpush1.msra.mxu0 0.0
  %371 = vmatprep.subr.mxu0 0.0
  %372 = vmatpush1.msra.mxu0 0.0
  %373 = vmatprep.subr.mxu0 0.0
  %374 = vmatpush1.msra.mxu0 0.0
  %375 = vmatprep.subr.mxu0 0.0
  %376 = vmatpush1.msra.mxu0 0.0
  %377 = vmatprep.subr.mxu0 0.0
  %378 = vmatpush1.msra.mxu0 0.0
  %379 = vmatprep.mubr.f32.mxu0 0.0
  %380 = vmatmul.mubr.f32.gmra.mrb[0].mxu0 %v295
  %v381 = vpop.f32.mrb[0].mxu0
  %v382 = vadd.f32 %v313, %v381
  %v383 = vpop.f32.mrb[0].mxu0
  %v384 = vadd.f32 %v314, %v383
  %385 = vdwg.mxu0
  %386 = vmax.xlane.f32.xlu0 %v384
  %v387 = vpop.xlane.xlu0 %386
  %v388 = vsub.f32 %v384, %v387
  %v389 = vmul.f32 %v388, 1.442695
  %v390 = vpow.pop %v389
  %391 = vadd.xlane.f32.xlu0 %v390
  %v392 = vpop.xlane.xlu0 %391
  %v393 = vlog2.pop %v392
  %v394 = vmul.f32 %v393, 0.6931472
  %s395 = scalar_lea.vmem %s3, 48
  %396 = vst [vmem:[%s395] sm:$0xff] %v382
  %v397 = vsub.f32 %v388, %v394
  %398 = vst [vmem:[%s395 + $0x8] sm:$0xff] %v397
  %s399 = scalar_lea.vmem %s1, 64
  %v400 = vld [vmem:[%s399] sm:$0xff]
  %v401 = vld [vmem:[%s399 + $0x8] sm:$0xff]
  %402 = vmatprep.subr.mxu0 %v21
  %403 = vmatpush1.msra.mxu0 %v20
  %404 = vmatprep.subr.mxu0 %v23
  %405 = vmatpush1.msra.mxu0 %v22
  %406 = vmatprep.subr.mxu0 %v25
  %407 = vmatpush1.msra.mxu0 %v24
  %408 = vmatprep.subr.mxu0 %v27
  %409 = vmatpush1.msra.mxu0 %v26
  %410 = vmatprep.subr.mxu0 %v29
  %411 = vmatpush1.msra.mxu0 %v28
  %412 = vmatprep.subr.mxu0 %v31
  %413 = vmatpush1.msra.mxu0 %v30
  %414 = vmatprep.subr.mxu0 %v33
  %415 = vmatpush1.msra.mxu0 %v32
  %416 = vmatprep.subr.mxu0 %v35
  %417 = vmatpush1.msra.mxu0 %v34
  %418 = vmatprep.subr.mxu0 %v37
  %419 = vmatpush1.msra.mxu0 %v36
  %420 = vmatprep.subr.mxu0 %v39
  %421 = vmatpush1.msra.mxu0 %v38
  %422 = vmatprep.subr.mxu0 %v41
  %423 = vmatpush1.msra.mxu0 %v40
  %424 = vmatprep.subr.mxu0 %v43
  %425 = vmatpush1.msra.mxu0 %v42
  %426 = vmatprep.subr.mxu0 %v45
  %427 = vmatpush1.msra.mxu0 %v44
  %428 = vmatprep.subr.mxu0 %v47
  %429 = vmatpush1.msra.mxu0 %v46
  %430 = vmatprep.subr.mxu0 %v49
  %431 = vmatpush1.msra.mxu0 %v48
  %432 = vmatprep.subr.mxu0 %v51
  %433 = vmatpush1.msra.mxu0 %v50
  %434 = vmatprep.subr.mxu0 0.0
  %435 = vmatpush1.msra.mxu0 0.0
  %436 = vmatprep.subr.mxu0 0.0
  %437 = vmatpush1.msra.mxu0 0.0
  %438 = vmatprep.subr.mxu0 0.0
  %439 = vmatpush1.msra.mxu0 0.0
  %440 = vmatprep.subr.mxu0 0.0
  %441 = vmatpush1.msra.mxu0 0.0
  %442 = vmatprep.subr.mxu0 0.0
  %443 = vmatpush1.msra.mxu0 0.0
  %444 = vmatprep.subr.mxu0 0.0
  %445 = vmatpush1.msra.mxu0 0.0
  %446 = vmatprep.subr.mxu0 0.0
  %447 = vmatpush1.msra.mxu0 0.0
  %448 = vmatprep.subr.mxu0 0.0
  %449 = vmatpush1.msra.mxu0 0.0
  %450 = vmatprep.subr.mxu0 0.0
  %451 = vmatpush1.msra.mxu0 0.0
  %452 = vmatprep.subr.mxu0 0.0
  %453 = vmatpush1.msra.mxu0 0.0
  %454 = vmatprep.subr.mxu0 0.0
  %455 = vmatpush1.msra.mxu0 0.0
  %456 = vmatprep.subr.mxu0 0.0
  %457 = vmatpush1.msra.mxu0 0.0
  %458 = vmatprep.subr.mxu0 0.0
  %459 = vmatpush1.msra.mxu0 0.0
  %460 = vmatprep.subr.mxu0 0.0
  %461 = vmatpush1.msra.mxu0 0.0
  %462 = vmatprep.subr.mxu0 0.0
  %463 = vmatpush1.msra.mxu0 0.0
  %464 = vmatprep.subr.mxu0 0.0
  %465 = vmatpush1.msra.mxu0 0.0
  %466 = vmatprep.mubr.f32.mxu0 0.0
  %467 = vmatmul.mubr.f32.gmra.mrb[0].mxu0 %v382
  %v468 = vpop.f32.mrb[0].mxu0
  %v469 = vadd.f32 %v400, %v468
  %v470 = vpop.f32.mrb[0].mxu0
  %v471 = vadd.f32 %v401, %v470
  %472 = vdwg.mxu0
  %473 = vmax.xlane.f32.xlu0 %v471
  %v474 = vpop.xlane.xlu0 %473
  %v475 = vsub.f32 %v471, %v474
  %v476 = vmul.f32 %v475, 1.442695
  %v477 = vpow.pop %v476
  %478 = vadd.xlane.f32.xlu0 %v477
  %v479 = vpop.xlane.xlu0 %478
  %v480 = vlog2.pop %v479
  %v481 = vmul.f32 %v480, 0.6931472
  %s482 = scalar_lea.vmem %s3, 64
  %483 = vst [vmem:[%s482] sm:$0xff] %v469
  %v484 = vsub.f32 %v475, %v481
  %485 = vst [vmem:[%s482 + $0x8] sm:$0xff] %v484
  %s486 = scalar_lea.vmem %s1, 80
  %v487 = vld [vmem:[%s486] sm:$0xff]
  %v488 = vld [vmem:[%s486 + $0x8] sm:$0xff]
  %489 = vmatprep.subr.mxu0 %v21
  %490 = vmatpush1.msra.mxu0 %v20
  %491 = vmatprep.subr.mxu0 %v23
  %492 = vmatpush1.msra.mxu0 %v22
  %493 = vmatprep.subr.mxu0 %v25
  %494 = vmatpush1.msra.mxu0 %v24
  %495 = vmatprep.subr.mxu0 %v27
  %496 = vmatpush1.msra.mxu0 %v26
  %497 = vmatprep.subr.mxu0 %v29
  %498 = vmatpush1.msra.mxu0 %v28
  %499 = vmatprep.subr.mxu0 %v31
  %500 = vmatpush1.msra.mxu0 %v30
  %501 = vmatprep.subr.mxu0 %v33
  %502 = vmatpush1.msra.mxu0 %v32
  %503 = vmatprep.subr.mxu0 %v35
  %504 = vmatpush1.msra.mxu0 %v34
  %505 = vmatprep.subr.mxu0 %v37
  %506 = vmatpush1.msra.mxu0 %v36
  %507 = vmatprep.subr.mxu0 %v39
  %508 = vmatpush1.msra.mxu0 %v38
  %509 = vmatprep.subr.mxu0 %v41
  %510 = vmatpush1.msra.mxu0 %v40
  %511 = vmatprep.subr.mxu0 %v43
  %512 = vmatpush1.msra.mxu0 %v42
  %513 = vmatprep.subr.mxu0 %v45
  %514 = vmatpush1.msra.mxu0 %v44
  %515 = vmatprep.subr.mxu0 %v47
  %516 = vmatpush1.msra.mxu0 %v46
  %517 = vmatprep.subr.mxu0 %v49
  %518 = vmatpush1.msra.mxu0 %v48
  %519 = vmatprep.subr.mxu0 %v51
  %520 = vmatpush1.msra.mxu0 %v50
  %521 = vmatprep.subr.mxu0 0.0
  %522 = vmatpush1.msra.mxu0 0.0
  %523 = vmatprep.subr.mxu0 0.0
  %524 = vmatpush1.msra.mxu0 0.0
  %525 = vmatprep.subr.mxu0 0.0
  %526 = vmatpush1.msra.mxu0 0.0
  %527 = vmatprep.subr.mxu0 0.0
  %528 = vmatpush1.msra.mxu0 0.0
  %529 = vmatprep.subr.mxu0 0.0
  %530 = vmatpush1.msra.mxu0 0.0
  %531 = vmatprep.subr.mxu0 0.0
  %532 = vmatpush1.msra.mxu0 0.0
  %533 = vmatprep.subr.mxu0 0.0
  %534 = vmatpush1.msra.mxu0 0.0
  %535 = vmatprep.subr.mxu0 0.0
  %536 = vmatpush1.msra.mxu0 0.0
  %537 = vmatprep.subr.mxu0 0.0
  %538 = vmatpush1.msra.mxu0 0.0
  %539 = vmatprep.subr.mxu0 0.0
  %540 = vmatpush1.msra.mxu0 0.0
  %541 = vmatprep.subr.mxu0 0.0
  %542 = vmatpush1.msra.mxu0 0.0
  %543 = vmatprep.subr.mxu0 0.0
  %544 = vmatpush1.msra.mxu0 0.0
  %545 = vmatprep.subr.mxu0 0.0
  %546 = vmatpush1.msra.mxu0 0.0
  %547 = vmatprep.subr.mxu0 0.0
  %548 = vmatpush1.msra.mxu0 0.0
  %549 = vmatprep.subr.mxu0 0.0
  %550 = vmatpush1.msra.mxu0 0.0
  %551 = vmatprep.subr.mxu0 0.0
  %552 = vmatpush1.msra.mxu0 0.0
  %553 = vmatprep.mubr.f32.mxu0 0.0
  %554 = vmatmul.mubr.f32.gmra.mrb[0].mxu0 %v469
  %v555 = vpop.f32.mrb[0].mxu0
  %v556 = vadd.f32 %v487, %v555
  %v557 = vpop.f32.mrb[0].mxu0
  %v558 = vadd.f32 %v488, %v557
  %559 = vdwg.mxu0
  %560 = vmax.xlane.f32.xlu0 %v558
  %v561 = vpop.xlane.xlu0 %560
  %v562 = vsub.f32 %v558, %v561
  %v563 = vmul.f32 %v562, 1.442695
  %v564 = vpow.pop %v563
  %565 = vadd.xlane.f32.xlu0 %v564
  %v566 = vpop.xlane.xlu0 %565
  %v567 = vlog2.pop %v566
  %v568 = vmul.f32 %v567, 0.6931472
  %s569 = scalar_lea.vmem %s3, 80
  %570 = vst [vmem:[%s569] sm:$0xff] %v556
  %v571 = vsub.f32 %v562, %v568
  %572 = vst [vmem:[%s569 + $0x8] sm:$0xff] %v571
  %s573 = scalar_lea.vmem %s1, 96
  %v574 = vld [vmem:[%s573] sm:$0xff]
  %v575 = vld [vmem:[%s573 + $0x8] sm:$0xff]
  %576 = vmatprep.subr.mxu0 %v21
  %577 = vmatpush1.msra.mxu0 %v20
  %578 = vmatprep.subr.mxu0 %v23
  %579 = vmatpush1.msra.mxu0 %v22
  %580 = vmatprep.subr.mxu0 %v25
  %581 = vmatpush1.msra.mxu0 %v24
  %582 = vmatprep.subr.mxu0 %v27
  %583 = vmatpush1.msra.mxu0 %v26
  %584 = vmatprep.subr.mxu0 %v29
  %585 = vmatpush1.msra.mxu0 %v28
  %586 = vmatprep.subr.mxu0 %v31
  %587 = vmatpush1.msra.mxu0 %v30
  %588 = vmatprep.subr.mxu0 %v33
  %589 = vmatpush1.msra.mxu0 %v32
  %590 = vmatprep.subr.mxu0 %v35
  %591 = vmatpush1.msra.mxu0 %v34
  %592 = vmatprep.subr.mxu0 %v37
  %593 = vmatpush1.msra.mxu0 %v36
  %594 = vmatprep.subr.mxu0 %v39
  %595 = vmatpush1.msra.mxu0 %v38
  %596 = vmatprep.subr.mxu0 %v41
  %597 = vmatpush1.msra.mxu0 %v40
  %598 = vmatprep.subr.mxu0 %v43
  %599 = vmatpush1.msra.mxu0 %v42
  %600 = vmatprep.subr.mxu0 %v45
  %601 = vmatpush1.msra.mxu0 %v44
  %602 = vmatprep.subr.mxu0 %v47
  %603 = vmatpush1.msra.mxu0 %v46
  %604 = vmatprep.subr.mxu0 %v49
  %605 = vmatpush1.msra.mxu0 %v48
  %606 = vmatprep.subr.mxu0 %v51
  %607 = vmatpush1.msra.mxu0 %v50
  %608 = vmatprep.subr.mxu0 0.0
  %609 = vmatpush1.msra.mxu0 0.0
  %610 = vmatprep.subr.mxu0 0.0
  %611 = vmatpush1.msra.mxu0 0.0
  %612 = vmatprep.subr.mxu0 0.0
  %613 = vmatpush1.msra.mxu0 0.0
  %614 = vmatprep.subr.mxu0 0.0
  %615 = vmatpush1.msra.mxu0 0.0
  %616 = vmatprep.subr.mxu0 0.0
  %617 = vmatpush1.msra.mxu0 0.0
  %618 = vmatprep.subr.mxu0 0.0
  %619 = vmatpush1.msra.mxu0 0.0
  %620 = vmatprep.subr.mxu0 0.0
  %621 = vmatpush1.msra.mxu0 0.0
  %622 = vmatprep.subr.mxu0 0.0
  %623 = vmatpush1.msra.mxu0 0.0
  %624 = vmatprep.subr.mxu0 0.0
  %625 = vmatpush1.msra.mxu0 0.0
  %626 = vmatprep.subr.mxu0 0.0
  %627 = vmatpush1.msra.mxu0 0.0
  %628 = vmatprep.subr.mxu0 0.0
  %629 = vmatpush1.msra.mxu0 0.0
  %630 = vmatprep.subr.mxu0 0.0
  %631 = vmatpush1.msra.mxu0 0.0
  %632 = vmatprep.subr.mxu0 0.0
  %633 = vmatpush1.msra.mxu0 0.0
  %634 = vmatprep.subr.mxu0 0.0
  %635 = vmatpush1.msra.mxu0 0.0
  %636 = vmatprep.subr.mxu0 0.0
  %637 = vmatpush1.msra.mxu0 0.0
  %638 = vmatprep.subr.mxu0 0.0
  %639 = vmatpush1.msra.mxu0 0.0
  %640 = vmatprep.mubr.f32.mxu0 0.0
  %641 = vmatmul.mubr.f32.gmra.mrb[0].mxu0 %v556
  %v642 = vpop.f32.mrb[0].mxu0
  %v643 = vadd.f32 %v574, %v642
  %v644 = vpop.f32.mrb[0].mxu0
  %v645 = vadd.f32 %v575, %v644
  %646 = vdwg.mxu0
  %647 = vmax.xlane.f32.xlu0 %v645
  %v648 = vpop.xlane.xlu0 %647
  %v649 = vsub.f32 %v645, %v648
  %v650 = vmul.f32 %v649, 1.442695
  %v651 = vpow.pop %v650
  %652 = vadd.xlane.f32.xlu0 %v651
  %v653 = vpop.xlane.xlu0 %652
  %v654 = vlog2.pop %v653
  %v655 = vmul.f32 %v654, 0.6931472
  %s656 = scalar_lea.vmem %s3, 96
  %657 = vst [vmem:[%s656] sm:$0xff] %v643
  %v658 = vsub.f32 %v649, %v655
  %659 = vst [vmem:[%s656 + $0x8] sm:$0xff] %v658
  %s660 = scalar_lea.vmem %s1, 112
  %v661 = vld [vmem:[%s660] sm:$0xff]
  %v662 = vld [vmem:[%s660 + $0x8] sm:$0xff]
  %663 = vmatprep.subr.mxu0 %v21
  %664 = vmatpush1.msra.mxu0 %v20
  %665 = vmatprep.subr.mxu0 %v23
  %666 = vmatpush1.msra.mxu0 %v22
  %667 = vmatprep.subr.mxu0 %v25
  %668 = vmatpush1.msra.mxu0 %v24
  %669 = vmatprep.subr.mxu0 %v27
  %670 = vmatpush1.msra.mxu0 %v26
  %671 = vmatprep.subr.mxu0 %v29
  %672 = vmatpush1.msra.mxu0 %v28
  %673 = vmatprep.subr.mxu0 %v31
  %674 = vmatpush1.msra.mxu0 %v30
  %675 = vmatprep.subr.mxu0 %v33
  %676 = vmatpush1.msra.mxu0 %v32
  %677 = vmatprep.subr.mxu0 %v35
  %678 = vmatpush1.msra.mxu0 %v34
  %679 = vmatprep.subr.mxu0 %v37
  %680 = vmatpush1.msra.mxu0 %v36
  %681 = vmatprep.subr.mxu0 %v39
  %682 = vmatpush1.msra.mxu0 %v38
  %683 = vmatprep.subr.mxu0 %v41
  %684 = vmatpush1.msra.mxu0 %v40
  %685 = vmatprep.subr.mxu0 %v43
  %686 = vmatpush1.msra.mxu0 %v42
  %687 = vmatprep.subr.mxu0 %v45
  %688 = vmatpush1.msra.mxu0 %v44
  %689 = vmatprep.subr.mxu0 %v47
  %690 = vmatpush1.msra.mxu0 %v46
  %691 = vmatprep.subr.mxu0 %v49
  %692 = vmatpush1.msra.mxu0 %v48
  %693 = vmatprep.subr.mxu0 %v51
  %694 = vmatpush1.msra.mxu0 %v50
  %695 = vmatprep.subr.mxu0 0.0
  %696 = vmatpush1.msra.mxu0 0.0
  %697 = vmatprep.subr.mxu0 0.0
  %698 = vmatpush1.msra.mxu0 0.0
  %699 = vmatprep.subr.mxu0 0.0
  %700 = vmatpush1.msra.mxu0 0.0
  %701 = vmatprep.subr.mxu0 0.0
  %702 = vmatpush1.msra.mxu0 0.0
  %703 = vmatprep.subr.mxu0 0.0
  %704 = vmatpush1.msra.mxu0 0.0
  %705 = vmatprep.subr.mxu0 0.0
  %706 = vmatpush1.msra.mxu0 0.0
  %707 = vmatprep.subr.mxu0 0.0
  %708 = vmatpush1.msra.mxu0 0.0
  %709 = vmatprep.subr.mxu0 0.0
  %710 = vmatpush1.msra.mxu0 0.0
  %711 = vmatprep.subr.mxu0 0.0
  %712 = vmatpush1.msra.mxu0 0.0
  %713 = vmatprep.subr.mxu0 0.0
  %714 = vmatpush1.msra.mxu0 0.0
  %715 = vmatprep.subr.mxu0 0.0
  %716 = vmatpush1.msra.mxu0 0.0
  %717 = vmatprep.subr.mxu0 0.0
  %718 = vmatpush1.msra.mxu0 0.0
  %719 = vmatprep.subr.mxu0 0.0
  %720 = vmatpush1.msra.mxu0 0.0
  %721 = vmatprep.subr.mxu0 0.0
  %722 = vmatpush1.msra.mxu0 0.0
  %723 = vmatprep.subr.mxu0 0.0
  %724 = vmatpush1.msra.mxu0 0.0
  %725 = vmatprep.subr.mxu0 0.0
  %726 = vmatpush1.msra.mxu0 0.0
  %727 = vmatprep.mubr.f32.mxu0 0.0
  %728 = vmatmul.mubr.f32.gmra.mrb[0].mxu0 %v643
  %v729 = vpop.f32.mrb[0].mxu0
  %v730 = vadd.f32 %v661, %v729
  %v731 = vpop.f32.mrb[0].mxu0
  %v732 = vadd.f32 %v662, %v731
  %733 = vdwg.mxu0
  %734 = vmax.xlane.f32.xlu0 %v732
  %v735 = vpop.xlane.xlu0 %734
  %v736 = vsub.f32 %v732, %v735
  %v737 = vmul.f32 %v736, 1.442695
  %v738 = vpow.pop %v737
  %739 = vadd.xlane.f32.xlu0 %v738
  %v740 = vpop.xlane.xlu0 %739
  %v741 = vlog2.pop %v740
  %v742 = vmul.f32 %v741, 0.6931472
  %s743 = scalar_lea.vmem %s3, 112
  %744 = vst [vmem:[%s743] sm:$0xff] %v730
  %v745 = vsub.f32 %v736, %v742
  %746 = vst [vmem:[%s743 + $0x8] sm:$0xff] %v745
  %747 = vst [vmem:[#allocation2] sm:$0xff] %v730
  // Predicated region
  $region18: #{rnn_sequence.1} parent=0 // pred_check
    _
  $region19: #{rnn_sequence.1} parent=0 // pred_check_branch
    %749 = sbr.rel (0) target = $region21
  $region20: #{rnn_sequence.1} parent=0 // pred_region
    _
  $region21: #{rnn_sequence.1} parent=0 // pred_fallthru
    _
  // Predicated region
  $region22: #{rnn_sequence.1} parent=0 // pred_check
    _
  $region23: #{rnn_sequence.1} parent=0 // pred_check_branch
    %751 = sbr.rel (0) target = $region25
  $region24: #{rnn_sequence.1} parent=0 // pred_region
    _
  $region25: #{rnn_sequence.1} parent=0 // pred_fallthru
    _

</llo_original>
